<compile_context>
chip_gen: v7x
topology: tpu7x:2x2x1
jax: 0.10.0
libtpu: 0.0.40
codegen_flags: <defaults>
</compile_context>

<pallas_src>
import functools

import jax
import jax.numpy as jnp
from jax.experimental import pallas as pl
from jax.experimental.pallas import tpu as pltpu

_LANE = 128
_BF16_SUBLANE = 16  # bf16 packs 16 rows per vreg sublane group


def _round_up(x, m):
    return ((x + m - 1) // m) * m


def _actor_kernel(n_layers, x_ref, *refs):
    """Fused MLP + row softmax on one batch tile.

    refs layout: (w0_ref, b0_ref, w1_ref, b1_ref, ..., out_ref).
    Weights are bf16, biases f32; matmuls accumulate in f32 on the MXU.
    """
    out_ref = refs[-1]
    wb_refs = refs[:-1]

    h = x_ref[...]  # bf16 (TB, n_features)
    logits = None
    for layer in range(n_layers):
        w = wb_refs[2 * layer][...]        # bf16 (in, out)
        b = wb_refs[2 * layer + 1][...]    # f32  (1, out)
        acc = jnp.dot(h, w, preferred_element_type=jnp.float32) + b
        if layer < n_layers - 1:
            acc = jnp.maximum(acc, 0.0)          # ReLU in f32
            h = acc.astype(jnp.bfloat16)         # bf16 operand for next MXU pass
        else:
            logits = acc                         # f32 logits (TB, n_actions)

    # Numerically stable row softmax over the (unpadded) action axis.
    m = jnp.max(logits, axis=-1, keepdims=True)
    e = jnp.exp(logits - m)
    denom = jnp.sum(e, axis=-1, keepdims=True)
    # Exact reciprocal: these probabilities typically feed sampling / log-prob.
    out_ref[...] = (e * pl.reciprocal(denom, approx=False)).astype(out_ref.dtype)


def prepare_actor_params(weights, biases):
    """Pad hidden widths to multiples of 128 and cast weights to bf16 (once).

    weights: list of [in_i, out_i] float32 (transposed vs. torch's [out, in])
    biases:  list of [out_i] float32
    Returns (params_list, dims) where params_list = [w0, b0, w1, b1, ...]
    and dims = [n_features, width0_p, ..., n_actions].
    """
    n_layers = len(weights)
    assert len(biases) == n_layers
    params = []
    dims = [weights[0].shape[0]]  # n_features stays unpadded
    for i, (w, b) in enumerate(zip(weights, biases)):
        fan_in, fan_out = w.shape
        in_p = dims[-1]  # previous (possibly padded) width
        out_p = fan_out if i == n_layers - 1 else _round_up(fan_out, _LANE)
        w_p = jnp.zeros((in_p, out_p), jnp.float32).at[:fan_in, :fan_out].set(w)
        b_p = jnp.zeros((out_p,), jnp.float32).at[:fan_out].set(b)
        params.append(w_p.astype(jnp.bfloat16))      # bf16 MXU operand
        params.append(b_p.reshape(1, out_p))          # f32, 2-D for VMEM broadcast
        dims.append(out_p)
    return params, dims


def _choose_batch_tile(batch, block_batch):
    # Multiple of 16 (bf16 tile); aim for >=2 grid steps so v7x megacore can
    # split the batch across its two TensorCores (no effect on v5e/v6e).
    half = _round_up(max(1, pl.cdiv(batch, 2)), _BF16_SUBLANE)
    return max(_BF16_SUBLANE, min(block_batch, half))


def actor_forward(x, params, dims, *, block_batch=2048):
    """Run the fused Actor forward pass.

    x:      [B, n_features] (any float dtype; cast to bf16 for the MXU path)
    params: output of prepare_actor_params
    dims:   output of prepare_actor_params
    returns [B, n_actions] float32 softmax probabilities
    """
    n_layers = len(params) // 2
    batch, n_features = x.shape
    assert n_features == dims[0]
    n_actions = dims[-1]

    x = x.astype(jnp.bfloat16)  # ideally the producer already emits bf16

    tb = _choose_batch_tile(batch, block_batch)
    grid = (pl.cdiv(batch, tb),)  # ragged last block handled by masked writes

    x_spec = pl.BlockSpec((tb, n_features), lambda i: (i, 0))
    out_spec = pl.BlockSpec((tb, n_actions), lambda i: (i, 0))
    param_specs = []
    for i in range(n_layers):
        in_p, out_p = dims[i], dims[i + 1]
        # Constant index_map -> fetched once, VMEM-resident across grid steps.
        param_specs.append(pl.BlockSpec((in_p, out_p), lambda i_: (0, 0)))
        param_specs.append(pl.BlockSpec((1, out_p), lambda i_: (0, 0)))

    mm_flops = 2 * batch * sum(dims[i] * dims[i + 1] for i in range(n_layers))
    param_bytes = sum(2 * dims[i] * dims[i + 1] + 4 * dims[i + 1] for i in range(n_layers))
    cost = pl.CostEstimate(
        flops=int(mm_flops),
        transcendentals=int(batch * n_actions),
        bytes_accessed=int(2 * batch * n_features + 4 * batch * n_actions + param_bytes),
    )

    kernel = functools.partial(_actor_kernel, n_layers)
    return pl.pallas_call(
        kernel,
        out_shape=jax.ShapeDtypeStruct((batch, n_actions), jnp.float32),
        grid=grid,
        in_specs=[x_spec] + param_specs,
        out_specs=out_spec,
        compiler_params=pltpu.CompilerParams(
            dimension_semantics=("parallel",),
            vmem_limit_bytes=32 * 1024 * 1024,  # v5e scoped default is only 16 MiB
        ),
        cost_estimate=cost,
    )(x, *params)


def init_actor_params(key, n_features, n_actions, n_width=32, n_depth=2):
    """nn.Linear-style init (uniform +/- 1/sqrt(fan_in)); weights as [in, out]."""
    layer_dim = [n_features] + [n_width for _ in range(n_depth)]
    shapes = list(zip(layer_dim[:-1], layer_dim[1:])) + [(n_width, n_actions)]
    weights, biases = [], []
    for (fan_in, fan_out) in shapes:
        key, kw, kb = jax.random.split(key, 3)
        bound = 1.0 / jnp.sqrt(jnp.float32(fan_in))
        weights.append(jax.random.uniform(kw, (fan_in, fan_out), jnp.float32, -bound, bound))
        biases.append(jax.random.uniform(kb, (fan_out,), jnp.float32, -bound, bound))
    return weights, biases


def actor_forward_ref(x, weights, biases):
    """Pure-JAX f32 reference for correctness checking."""
    h = x
    for i, (w, b) in enumerate(zip(weights, biases)):
        h = h @ w + b
        if i < len(weights) - 1:
            h = jnp.maximum(h, 0.0)
    return jax.nn.softmax(h, axis=-1)


if __name__ == "__main__":
    key = jax.random.PRNGKey(0)
    key, kx, kx2 = jax.random.split(key, 3)

    # Small, deterministic example consistent with Actor(n_features, n_actions):
    n_features, n_actions, n_width, n_depth, batch = 8, 4, 32, 2, 2
    weights, biases = init_actor_params(key, n_features, n_actions, n_width, n_depth)
    params, dims = prepare_actor_params(weights, biases)

    x = jax.random.normal(kx, (batch, n_features), dtype=jnp.float32)
    out = jax.block_until_ready(actor_forward(x, params, dims))
    ref = actor_forward_ref(x, weights, biases)

    assert out.shape == (batch, n_actions)
    # bf16 matmul operands -> allow ~2e-2 tolerance vs. the f32 reference.
    assert jnp.allclose(out, ref, atol=2e-2, rtol=2e-2)
    # Exact reciprocal -> rows sum to 1 to f32 precision.
    assert jnp.allclose(jnp.sum(out, axis=-1), jnp.ones((batch,)), atol=1e-3)

    # Second case: multiple grid steps + a ragged last block (37 = 16 + 16 + 5).
    batch2 = 37
    x2 = jax.random.normal(kx2, (batch2, n_features), dtype=jnp.float32)
    out2 = jax.block_until_ready(actor_forward(x2, params, dims, block_batch=16))
    ref2 = actor_forward_ref(x2, weights, biases)
    assert out2.shape == (batch2, n_actions)
    assert jnp.allclose(out2, ref2, atol=2e-2, rtol=2e-2)
    assert jnp.allclose(jnp.sum(out2, axis=-1), jnp.ones((batch2,)), atol=1e-3)

    print("KERNEL_OK")
</pallas_src>

<mosaic_0001>
module attributes {stable_mosaic.version = 11 : i64} {
  func.func @_actor_kernel(%arg0: i32, %arg1: memref<16x8xbf16, #tpu.memory_space<vmem>>, %arg2: memref<8x128xbf16, #tpu.memory_space<vmem>>, %arg3: memref<1x128xf32, #tpu.memory_space<vmem>>, %arg4: memref<128x128xbf16, #tpu.memory_space<vmem>>, %arg5: memref<1x128xf32, #tpu.memory_space<vmem>>, %arg6: memref<128x4xbf16, #tpu.memory_space<vmem>>, %arg7: memref<1x4xf32, #tpu.memory_space<vmem>>, %arg8: memref<16x4xf32, #tpu.memory_space<vmem>>) attributes {dimension_semantics = [#tpu.dimension_semantics<parallel>], iteration_bounds = array<i64: 1>, scalar_prefetch = 0 : i64, scratch_operands = 0 : i64, tpu.core_type = #tpu.core_type<tc>, window_params = [{transform_indices = @transform_0, window_bounds = array<i64: 16, 8>}, {pipeline_mode = #tpu.pipeline_mode<synchronous>, transform_indices = @transform_1, window_bounds = array<i64: 8, 128>}, {pipeline_mode = #tpu.pipeline_mode<synchronous>, transform_indices = @transform_2, window_bounds = array<i64: 1, 128>}, {pipeline_mode = #tpu.pipeline_mode<synchronous>, transform_indices = @transform_3, window_bounds = array<i64: 128, 128>}, {pipeline_mode = #tpu.pipeline_mode<synchronous>, transform_indices = @transform_4, window_bounds = array<i64: 1, 128>}, {pipeline_mode = #tpu.pipeline_mode<synchronous>, transform_indices = @transform_5, window_bounds = array<i64: 128, 4>}, {pipeline_mode = #tpu.pipeline_mode<synchronous>, transform_indices = @transform_6, window_bounds = array<i64: 1, 4>}, {transform_indices = @transform_7, window_bounds = array<i64: 16, 4>}]} {
    %c0 = arith.constant 0 : index
    %c0_0 = arith.constant 0 : index
    %0 = vector.load %arg1[%c0, %c0_0] : memref<16x8xbf16, #tpu.memory_space<vmem>>, vector<16x8xbf16>
    %c0_1 = arith.constant 0 : index
    %c0_2 = arith.constant 0 : index
    %1 = vector.load %arg2[%c0_1, %c0_2] : memref<8x128xbf16, #tpu.memory_space<vmem>>, vector<8x128xbf16>
    %c0_3 = arith.constant 0 : index
    %c0_4 = arith.constant 0 : index
    %2 = vector.load %arg3[%c0_3, %c0_4] : memref<1x128xf32, #tpu.memory_space<vmem>>, vector<1x128xf32>
    %cst = arith.constant dense<0.000000e+00> : vector<16x128xf32>
    %3 = tpu.matmul %0, %1, %cst {dimension_numbers = #tpu.dot_dimension_numbers<[1], [0], [0], [1], [0, 0, 1, 1], [], []>} : vector<16x8xbf16>, vector<8x128xbf16>, vector<16x128xf32> -> vector<16x128xf32>
    %4 = vector.broadcast %2 : vector<1x128xf32> to vector<16x128xf32>
    %5 = arith.addf %3, %4 : vector<16x128xf32>
    %cst_5 = arith.constant 0.000000e+00 : f32
    %6 = vector.broadcast %cst_5 : f32 to vector<16x128xf32>
    %7 = arith.maximumf %5, %6 : vector<16x128xf32>
    %8 = arith.truncf %7 : vector<16x128xf32> to vector<16x128xbf16>
    %c0_6 = arith.constant 0 : index
    %c0_7 = arith.constant 0 : index
    %9 = vector.load %arg4[%c0_6, %c0_7] : memref<128x128xbf16, #tpu.memory_space<vmem>>, vector<128x128xbf16>
    %c0_8 = arith.constant 0 : index
    %c0_9 = arith.constant 0 : index
    %10 = vector.load %arg5[%c0_8, %c0_9] : memref<1x128xf32, #tpu.memory_space<vmem>>, vector<1x128xf32>
    %cst_10 = arith.constant dense<0.000000e+00> : vector<16x128xf32>
    %11 = tpu.matmul %8, %9, %cst_10 {dimension_numbers = #tpu.dot_dimension_numbers<[1], [0], [0], [1], [0, 0, 1, 1], [], []>} : vector<16x128xbf16>, vector<128x128xbf16>, vector<16x128xf32> -> vector<16x128xf32>
    %12 = vector.broadcast %10 : vector<1x128xf32> to vector<16x128xf32>
    %13 = arith.addf %11, %12 : vector<16x128xf32>
    %cst_11 = arith.constant 0.000000e+00 : f32
    %14 = vector.broadcast %cst_11 : f32 to vector<16x128xf32>
    %15 = arith.maximumf %13, %14 : vector<16x128xf32>
    %16 = arith.truncf %15 : vector<16x128xf32> to vector<16x128xbf16>
    %c0_12 = arith.constant 0 : index
    %c0_13 = arith.constant 0 : index
    %17 = vector.load %arg6[%c0_12, %c0_13] : memref<128x4xbf16, #tpu.memory_space<vmem>>, vector<128x4xbf16>
    %c0_14 = arith.constant 0 : index
    %c0_15 = arith.constant 0 : index
    %18 = vector.load %arg7[%c0_14, %c0_15] : memref<1x4xf32, #tpu.memory_space<vmem>>, vector<1x4xf32>
    %cst_16 = arith.constant dense<0.000000e+00> : vector<16x4xf32>
    %19 = tpu.matmul %16, %17, %cst_16 {dimension_numbers = #tpu.dot_dimension_numbers<[1], [0], [0], [1], [0, 0, 1, 1], [], []>} : vector<16x128xbf16>, vector<128x4xbf16>, vector<16x4xf32> -> vector<16x4xf32>
    %20 = vector.broadcast %18 : vector<1x4xf32> to vector<16x4xf32>
    %21 = arith.addf %19, %20 : vector<16x4xf32>
    %cst_17 = arith.constant dense<0xFF800000> : vector<16xf32>
    %22 = vector.multi_reduction <maximumf>, %21, %cst_17 [1] : vector<16x4xf32> to vector<16xf32>
    %23 = vector.shape_cast %22 : vector<16xf32> to vector<16x1xf32>
    %24 = vector.broadcast %23 : vector<16x1xf32> to vector<16x4xf32>
    %25 = arith.subf %21, %24 : vector<16x4xf32>
    %26 = math.exp %25 : vector<16x4xf32>
    %cst_18 = arith.constant dense<0.000000e+00> : vector<16xf32>
    %27 = vector.multi_reduction <add>, %26, %cst_18 [1] : vector<16x4xf32> to vector<16xf32>
    %28 = vector.shape_cast %27 : vector<16xf32> to vector<16x1xf32>
    %29 = tpu.reciprocal %28 : vector<16x1xf32> -> vector<16x1xf32>
    %30 = vector.broadcast %29 : vector<16x1xf32> to vector<16x4xf32>
    %31 = arith.mulf %26, %30 : vector<16x4xf32>
    %c0_19 = arith.constant 0 : index
    %c0_20 = arith.constant 0 : index
    %32 = vector.load %arg8[%c0_19, %c0_20] : memref<16x4xf32, #tpu.memory_space<vmem>>, vector<16x4xf32>
    tpu.vector_store %arg8[%c0_19, %c0_20], %31 {strides = array<i32>} : memref<16x4xf32, #tpu.memory_space<vmem>>, vector<16x4xf32>,
    return
  }
  func.func @transform_0(%arg0: i32) -> (i32, i32) {
    %c0_i32 = arith.constant 0 : i32
    %c0_i32_0 = arith.constant 0 : i32
    return %arg0, %c0_i32 : i32, i32
  }
  func.func @transform_1(%arg0: i32) -> (i32, i32) {
    %c0_i32 = arith.constant 0 : i32
    %c0_i32_0 = arith.constant 0 : i32
    %c0_i32_1 = arith.constant 0 : i32
    return %c0_i32, %c0_i32_0 : i32, i32
  }
  func.func @transform_2(%arg0: i32) -> (i32, i32) {
    %c0_i32 = arith.constant 0 : i32
    %c0_i32_0 = arith.constant 0 : i32
    %c0_i32_1 = arith.constant 0 : i32
    return %c0_i32, %c0_i32_0 : i32, i32
  }
  func.func @transform_3(%arg0: i32) -> (i32, i32) {
    %c0_i32 = arith.constant 0 : i32
    %c0_i32_0 = arith.constant 0 : i32
    %c0_i32_1 = arith.constant 0 : i32
    return %c0_i32, %c0_i32_0 : i32, i32
  }
  func.func @transform_4(%arg0: i32) -> (i32, i32) {
    %c0_i32 = arith.constant 0 : i32
    %c0_i32_0 = arith.constant 0 : i32
    %c0_i32_1 = arith.constant 0 : i32
    return %c0_i32, %c0_i32_0 : i32, i32
  }
  func.func @transform_5(%arg0: i32) -> (i32, i32) {
    %c0_i32 = arith.constant 0 : i32
    %c0_i32_0 = arith.constant 0 : i32
    %c0_i32_1 = arith.constant 0 : i32
    return %c0_i32, %c0_i32_0 : i32, i32
  }
  func.func @transform_6(%arg0: i32) -> (i32, i32) {
    %c0_i32 = arith.constant 0 : i32
    %c0_i32_0 = arith.constant 0 : i32
    %c0_i32_1 = arith.constant 0 : i32
    return %c0_i32, %c0_i32_0 : i32, i32
  }
  func.func @transform_7(%arg0: i32) -> (i32, i32) {
    %c0_i32 = arith.constant 0 : i32
    %c0_i32_0 = arith.constant 0 : i32
    return %arg0, %c0_i32 : i32, i32
  }
}

</mosaic_0001>

<llo_original>
// kernel: tpu_custom_call.1
$region0: #{tpu_custom_call.1}
  #allocation0 [shape = 'u32[]', space=smem, size = 0x4, offset = 0x4, fixed_abs, tag = 'smem constant byte address 0x4 - core index']
  #allocation1 [shape = 'u32[144,128]{1,0:T(1,128)}', space=vmem, size = 0x12000, scoped, tag = 'internal scratch']
  %s0 = inlined_call_operand.vmem [shape: bf16[2,8], index: 0, kind: input, shape index: {}]
  %s1 = inlined_call_operand.vmem [shape: bf16[8,128], index: 1, kind: input, shape index: {}]
  %s2 = inlined_call_operand.vmem [shape: f32[1,128], index: 2, kind: input, shape index: {}]
  %s3 = inlined_call_operand.vmem [shape: bf16[128,128], index: 3, kind: input, shape index: {}]
  %s4 = inlined_call_operand.vmem [shape: f32[1,128], index: 4, kind: input, shape index: {}]
  %s5 = inlined_call_operand.vmem [shape: bf16[128,4], index: 5, kind: input, shape index: {}]
  %s6 = inlined_call_operand.vmem [shape: f32[1,4], index: 6, kind: input, shape index: {}]
  %s7 = inlined_call_operand.hbm [shape: f32[2,4], index: 7, kind: output, shape index: {}]
  %s8 = sld [smem:[#allocation0]]
  $region38: #{tpu_custom_call.1} parent=0
    _
  %s10 = ssub.s32 1, %s8
  %s11 = scalar_select 0, %s10, %s8
  $region1: #{tpu_custom_call.1} parent=0
    #allocation2 [shape = 'u8[8192]{0}', space=vmem, size = 0x2000, scoped, tag = 'output window, operand 0, single buffered']
    #allocation3 [shape = 's32[1]{0}', space=sflag, size = 0x4, scoped, tag = 'scoped memory for tpu_custom_call.1']
    %12 = vsyncpa [#allocation3], 0
    // Predicated region
    $region2: #{tpu_custom_call.1} parent=1 // pred_check
      _
    $region3: #{tpu_custom_call.1} parent=1 // pred_check_branch
      %14 = sbr.rel (0) target = $region5
    $region4: #{tpu_custom_call.1} parent=1 // pred_region
      _
    $region5: #{tpu_custom_call.1} parent=1 // pred_fallthru
      _
    // Predicated region
    $region6: #{tpu_custom_call.1} parent=1 // pred_check
      _
    $region7: #{tpu_custom_call.1} parent=1 // pred_check_branch
      %16 = sbr.rel (0) target = $region9
    $region8: #{tpu_custom_call.1} parent=1 // pred_region
      _
    $region9: #{tpu_custom_call.1} parent=1 // pred_fallthru
      _
    // Predicated region
    $region10: #{tpu_custom_call.1} parent=1 // pred_check
      _
    $region11: #{tpu_custom_call.1} parent=1 // pred_check_branch
      %18 = sbr.rel (0) target = $region13
    $region12: #{tpu_custom_call.1} parent=1 // pred_region
      _
    $region13: #{tpu_custom_call.1} parent=1 // pred_fallthru
      _
    // Predicated region
    $region14: #{tpu_custom_call.1} parent=1 // pred_check
      _
    $region15: #{tpu_custom_call.1} parent=1 // pred_check_branch
      %20 = sbr.rel (0) target = $region17
    $region16: #{tpu_custom_call.1} parent=1 // pred_region
      _
    $region17: #{tpu_custom_call.1} parent=1 // pred_fallthru
      _
    // Predicated region
    $region18: #{tpu_custom_call.1} parent=1 // pred_check
      _
    $region19: #{tpu_custom_call.1} parent=1 // pred_check_branch
      %22 = sbr.rel (0) target = $region21
    $region20: #{tpu_custom_call.1} parent=1 // pred_region
      _
    $region21: #{tpu_custom_call.1} parent=1 // pred_fallthru
      _
    // Predicated region
    $region22: #{tpu_custom_call.1} parent=1 // pred_check
      _
    $region23: #{tpu_custom_call.1} parent=1 // pred_check_branch
      %24 = sbr.rel (0) target = $region25
    $region24: #{tpu_custom_call.1} parent=1 // pred_region
      _
    $region25: #{tpu_custom_call.1} parent=1 // pred_fallthru
      _
    // Predicated region
    $region26: #{tpu_custom_call.1} parent=1 // pred_check
      _
    $region27: #{tpu_custom_call.1} parent=1 // pred_check_branch
      %26 = sbr.rel (0) target = $region29
    $region28: #{tpu_custom_call.1} parent=1 // pred_region
      _
    $region29: #{tpu_custom_call.1} parent=1 // pred_fallthru
      _
    %v28 = vld [vmem:[%s0] sm:$0x1]
    %v29 = vld [vmem:[%s0 + $0x1] sm:$0x1]
    %v30 = vld [vmem:[%s0 + $0x2] sm:$0x1]
    %v31 = vld [vmem:[%s0 + $0x3] sm:$0x1]
    %v32 = vld [vmem:[%s0 + $0x4] sm:$0x1]
    %v33 = vld [vmem:[%s0 + $0x5] sm:$0x1]
    %v34 = vld [vmem:[%s0 + $0x6] sm:$0x1]
    %v35 = vld [vmem:[%s0 + $0x7] sm:$0x1]
    %v36 = vld [vmem:[%s1] sm:$0xf]
    %v37 = vld [vmem:[%s2] sm:$0x1]
    %v39 = vlaneseq
    %v40 = vshrl.u32 %v39, 7
    %v41 = vsub.s32 0, %v40
    %v42 = vrot.slane %v37, %v41
    %v52 = vcombine.low %v28, %v29
    %v53 = vcombine.low %v30, %v31
    %v54 = vcombine.low %v32, %v33
    %v55 = vcombine.low %v34, %v35
    %v57 = vunpack.c.l.s4 1966171168
    %v58 = vunpack.c.0.s8 %v57
    %v59 = vlaneseq
    %v60 = vshrl.u32 %v59, 7
    %v61 = vsub.s32 %v58, %v60
    %v62 = vrot.slane %v52, %v61
    %v64 = vunpack.c.l.s4 1966171168
    %v65 = vunpack.c.0.s8 %v64
    %v66 = vlaneseq
    %v67 = vshrl.u32 %v66, 7
    %v68 = vsub.s32 %v65, %v67
    %v69 = vrot.slane %v53, %v68
    %v71 = vunpack.c.l.s4 1966171168
    %v72 = vunpack.c.0.s8 %v71
    %v73 = vlaneseq
    %v74 = vshrl.u32 %v73, 7
    %v75 = vsub.s32 %v72, %v74
    %v76 = vrot.slane %v54, %v75
    %v78 = vunpack.c.l.s4 1966171168
    %v79 = vunpack.c.0.s8 %v78
    %v80 = vlaneseq
    %v81 = vshrl.u32 %v80, 7
    %v82 = vsub.s32 %v79, %v81
    %v83 = vrot.slane %v55, %v82
    %v84 = vcombine.low %v62, %v69
    %v85 = vcombine.low %v76, %v83
    %v87 = vunpack.c.l.s4 1966171168
    %v88 = vunpack.c.0.s8 %v87
    %v89 = vlaneseq
    %v90 = vshrl.u32 %v89, 7
    %v91 = vsub.s32 %v88, %v90
    %v92 = vrot.slane %v84, %v91
    %v94 = vunpack.c.l.s4 1966171168
    %v95 = vunpack.c.0.s8 %v94
    %v96 = vlaneseq
    %v97 = vshrl.u32 %v96, 7
    %v98 = vsub.s32 %v95, %v97
    %v99 = vrot.slane %v85, %v98
    %v100 = vcombine.low %v92, %v99
    %vm101 = vcmask 64512
    %v103 = vsel %vm101, %v100, 0
    %vm105 = vcmask 1043456
    %v107 = vsel %vm105, %v36, 0
    %109 = vmatprep.subr.bf16.mxu0 0
    %110 = vmatpush1.bf16.msra.mxu0 %v107
    %111 = vmatprep.subr.bf16.mxu0 0
    %112 = vmatpush1.bf16.msra.mxu0 0
    %113 = vmatprep.subr.bf16.mxu0 0
    %114 = vmatpush1.bf16.msra.mxu0 0
    %115 = vmatprep.subr.bf16.mxu0 0
    %116 = vmatpush1.bf16.msra.mxu0 0
    %117 = vmatprep.subr.bf16.mxu0 0
    %118 = vmatpush1.bf16.msra.mxu0 0
    %119 = vmatprep.subr.bf16.mxu0 0
    %120 = vmatpush1.bf16.msra.mxu0 0
    %121 = vmatprep.subr.bf16.mxu0 0
    %122 = vmatpush1.bf16.msra.mxu0 0
    %123 = vmatprep.subr.bf16.mxu0 0
    %124 = vmatpush1.bf16.msra.mxu0 0
    %125 = vmatprep.subr.bf16.mxu0 0
    %126 = vmatpush1.bf16.msra.mxu0 0
    %127 = vmatprep.subr.bf16.mxu0 0
    %128 = vmatpush1.bf16.msra.mxu0 0
    %129 = vmatprep.subr.bf16.mxu0 0
    %130 = vmatpush1.bf16.msra.mxu0 0
    %131 = vmatprep.subr.bf16.mxu0 0
    %132 = vmatpush1.bf16.msra.mxu0 0
    %133 = vmatprep.subr.bf16.mxu0 0
    %134 = vmatpush1.bf16.msra.mxu0 0
    %135 = vmatprep.subr.bf16.mxu0 0
    %136 = vmatpush1.bf16.msra.mxu0 0
    %137 = vmatprep.subr.bf16.mxu0 0
    %138 = vmatpush1.bf16.msra.mxu0 0
    %139 = vmatprep.subr.bf16.mxu0 0
    %140 = vmatpush1.bf16.msra.mxu0 0
    %141 = vmatprep.mubr.bf16.mxu0 0
    %142 = vmatmul.mubr.bf16.gmra.mrb[0].mxu0 %v103
    %v143 = vpop.f32.mrb[0].mxu0
    %v144 = vadd.f32 %v42, %v143
    %v145 = vpop.f32.mrb[0].mxu0
    %v146 = vpop.f32.mrb[0].mxu0
    %v147 = vadd.f32 %v42, %v146
    %v148 = vpop.f32.mrb[0].mxu0
    %149 = vdwg.mxu0
    %v150 = vmax.f32 %v144, 0.0
    %v151 = vmax.f32 %v147, 0.0
    %v152 = vpack.c.bf16 %v151, %v150
    %v153 = vld [vmem:[%s3] sm:$0xf]
    %v154 = vld [vmem:[%s3 + $0x4] sm:$0xf]
    %v155 = vld [vmem:[%s3 + $0x8] sm:$0xf]
    %v156 = vld [vmem:[%s3 + $0xc] sm:$0xf]
    %v157 = vld [vmem:[%s3 + $0x10] sm:$0xf]
    %v158 = vld [vmem:[%s3 + $0x14] sm:$0xf]
    %v159 = vld [vmem:[%s3 + $0x18] sm:$0xf]
    %v160 = vld [vmem:[%s3 + $0x1c] sm:$0xf]
    %v161 = vld [vmem:[%s3 + $0x20] sm:$0xf]
    %v162 = vld [vmem:[%s3 + $0x24] sm:$0xf]
    %v163 = vld [vmem:[%s3 + $0x28] sm:$0xf]
    %v164 = vld [vmem:[%s3 + $0x2c] sm:$0xf]
    %v165 = vld [vmem:[%s3 + $0x30] sm:$0xf]
    %v166 = vld [vmem:[%s3 + $0x34] sm:$0xf]
    %v167 = vld [vmem:[%s3 + $0x38] sm:$0xf]
    %v168 = vld [vmem:[%s3 + $0x3c] sm:$0xf]
    %v169 = vld [vmem:[%s4] sm:$0x1]
    %v171 = vlaneseq
    %v172 = vshrl.u32 %v171, 7
    %v173 = vsub.s32 0, %v172
    %v174 = vrot.slane %v169, %v173
    %v192 = vunpack.c.l.b16 %v153
    %v193 = vunpack.c.l.b16 %v154
    %v194 = vunpack.c.l.b16 %v155
    %v195 = vunpack.c.l.b16 %v156
    %v196 = vunpack.c.l.b16 %v157
    %v197 = vunpack.c.l.b16 %v158
    %v198 = vunpack.c.l.b16 %v159
    %v199 = vunpack.c.l.b16 %v160
    %v200 = vunpack.c.l.b16 %v161
    %v201 = vunpack.c.l.b16 %v162
    %v202 = vunpack.c.l.b16 %v163
    %v203 = vunpack.c.l.b16 %v164
    %v204 = vunpack.c.l.b16 %v165
    %v205 = vunpack.c.l.b16 %v166
    %v206 = vunpack.c.l.b16 %v167
    %v207 = vunpack.c.l.b16 %v168
    %v208 = vpack.c.b16 %v193, %v192
    %v209 = vpack.c.b16 %v195, %v194
    %v210 = vpack.c.b16 %v197, %v196
    %v211 = vpack.c.b16 %v199, %v198
    %v212 = vpack.c.b16 %v201, %v200
    %v213 = vpack.c.b16 %v203, %v202
    %v214 = vpack.c.b16 %v205, %v204
    %v215 = vpack.c.b16 %v207, %v206
    %224 = vmatprep.subr.bf16.mxu0 0
    %225 = vmatpush1.bf16.msra.mxu0 %v208
    %226 = vmatprep.subr.bf16.mxu0 0
    %227 = vmatpush1.bf16.msra.mxu0 %v209
    %228 = vmatprep.subr.bf16.mxu0 0
    %229 = vmatpush1.bf16.msra.mxu0 %v210
    %230 = vmatprep.subr.bf16.mxu0 0
    %231 = vmatpush1.bf16.msra.mxu0 %v211
    %232 = vmatprep.subr.bf16.mxu0 0
    %233 = vmatpush1.bf16.msra.mxu0 %v212
    %234 = vmatprep.subr.bf16.mxu0 0
    %235 = vmatpush1.bf16.msra.mxu0 %v213
    %236 = vmatprep.subr.bf16.mxu0 0
    %237 = vmatpush1.bf16.msra.mxu0 %v214
    %238 = vmatprep.subr.bf16.mxu0 0
    %239 = vmatpush1.bf16.msra.mxu0 %v215
    %240 = vmatprep.subr.bf16.mxu0 0
    %241 = vmatpush1.bf16.msra.mxu0 0
    %242 = vmatprep.subr.bf16.mxu0 0
    %243 = vmatpush1.bf16.msra.mxu0 0
    %244 = vmatprep.subr.bf16.mxu0 0
    %245 = vmatpush1.bf16.msra.mxu0 0
    %246 = vmatprep.subr.bf16.mxu0 0
    %247 = vmatpush1.bf16.msra.mxu0 0
    %248 = vmatprep.subr.bf16.mxu0 0
    %249 = vmatpush1.bf16.msra.mxu0 0
    %250 = vmatprep.subr.bf16.mxu0 0
    %251 = vmatpush1.bf16.msra.mxu0 0
    %252 = vmatprep.subr.bf16.mxu0 0
    %253 = vmatpush1.bf16.msra.mxu0 0
    %254 = vmatprep.subr.bf16.mxu0 0
    %255 = vmatpush1.bf16.msra.mxu0 0
    %256 = vmatprep.mubr.bf16.mxu0 0
    %257 = vmatmul.mubr.bf16.gmra.mrb[0].mxu0 %v152
    %v258 = vpop.f32.mrb[0].mxu0
    %v259 = vadd.f32 %v174, %v258
    %v260 = vpop.f32.mrb[0].mxu0
    %v261 = vpop.f32.mrb[0].mxu0
    %v262 = vadd.f32 %v174, %v261
    %v263 = vpop.f32.mrb[0].mxu0
    %264 = vdwg.mxu0
    %v265 = vmax.f32 %v259, 0.0
    %v266 = vmax.f32 %v262, 0.0
    %v267 = vpack.c.bf16 %v266, %v265
    %v268 = vld [vmem:[%s5] sm:$0xf]
    %v269 = vld [vmem:[%s5 + $0x4] sm:$0xf]
    %v270 = vld [vmem:[%s5 + $0x8] sm:$0xf]
    %v271 = vld [vmem:[%s5 + $0xc] sm:$0xf]
    %v272 = vld [vmem:[%s5 + $0x10] sm:$0xf]
    %v273 = vld [vmem:[%s5 + $0x14] sm:$0xf]
    %v274 = vld [vmem:[%s5 + $0x18] sm:$0xf]
    %v275 = vld [vmem:[%s5 + $0x1c] sm:$0xf]
    %v276 = vld [vmem:[%s5 + $0x20] sm:$0xf]
    %v277 = vld [vmem:[%s5 + $0x24] sm:$0xf]
    %v278 = vld [vmem:[%s5 + $0x28] sm:$0xf]
    %v279 = vld [vmem:[%s5 + $0x2c] sm:$0xf]
    %v280 = vld [vmem:[%s5 + $0x30] sm:$0xf]
    %v281 = vld [vmem:[%s5 + $0x34] sm:$0xf]
    %v282 = vld [vmem:[%s5 + $0x38] sm:$0xf]
    %v283 = vld [vmem:[%s5 + $0x3c] sm:$0xf]
    %v284 = vld [vmem:[%s6] sm:$0x1]
    %v286 = vlaneseq
    %v287 = vshrl.u32 %v286, 7
    %v288 = vsub.s32 0, %v287
    %v289 = vrot.slane %v284, %v288
    %v307 = vunpack.c.l.b16 %v268
    %v308 = vunpack.c.l.b16 %v269
    %v309 = vunpack.c.l.b16 %v270
    %v310 = vunpack.c.l.b16 %v271
    %v311 = vunpack.c.l.b16 %v272
    %v312 = vunpack.c.l.b16 %v273
    %v313 = vunpack.c.l.b16 %v274
    %v314 = vunpack.c.l.b16 %v275
    %v315 = vunpack.c.l.b16 %v276
    %v316 = vunpack.c.l.b16 %v277
    %v317 = vunpack.c.l.b16 %v278
    %v318 = vunpack.c.l.b16 %v279
    %v319 = vunpack.c.l.b16 %v280
    %v320 = vunpack.c.l.b16 %v281
    %v321 = vunpack.c.l.b16 %v282
    %v322 = vunpack.c.l.b16 %v283
    %v323 = vpack.c.b16 %v308, %v307
    %v324 = vpack.c.b16 %v310, %v309
    %v325 = vpack.c.b16 %v312, %v311
    %v326 = vpack.c.b16 %v314, %v313
    %v327 = vpack.c.b16 %v316, %v315
    %v328 = vpack.c.b16 %v318, %v317
    %v329 = vpack.c.b16 %v320, %v319
    %v330 = vpack.c.b16 %v322, %v321
    %339 = vmatprep.subr.bf16.mxu0 0
    %340 = vmatpush1.bf16.msra.mxu0 %v323
    %341 = vmatprep.subr.bf16.mxu0 0
    %342 = vmatpush1.bf16.msra.mxu0 %v324
    %343 = vmatprep.subr.bf16.mxu0 0
    %344 = vmatpush1.bf16.msra.mxu0 %v325
    %345 = vmatprep.subr.bf16.mxu0 0
    %346 = vmatpush1.bf16.msra.mxu0 %v326
    %347 = vmatprep.subr.bf16.mxu0 0
    %348 = vmatpush1.bf16.msra.mxu0 %v327
    %349 = vmatprep.subr.bf16.mxu0 0
    %350 = vmatpush1.bf16.msra.mxu0 %v328
    %351 = vmatprep.subr.bf16.mxu0 0
    %352 = vmatpush1.bf16.msra.mxu0 %v329
    %353 = vmatprep.subr.bf16.mxu0 0
    %354 = vmatpush1.bf16.msra.mxu0 %v330
    %355 = vmatprep.subr.bf16.mxu0 0
    %356 = vmatpush1.bf16.msra.mxu0 0
    %357 = vmatprep.subr.bf16.mxu0 0
    %358 = vmatpush1.bf16.msra.mxu0 0
    %359 = vmatprep.subr.bf16.mxu0 0
    %360 = vmatpush1.bf16.msra.mxu0 0
    %361 = vmatprep.subr.bf16.mxu0 0
    %362 = vmatpush1.bf16.msra.mxu0 0
    %363 = vmatprep.subr.bf16.mxu0 0
    %364 = vmatpush1.bf16.msra.mxu0 0
    %365 = vmatprep.subr.bf16.mxu0 0
    %366 = vmatpush1.bf16.msra.mxu0 0
    %367 = vmatprep.subr.bf16.mxu0 0
    %368 = vmatpush1.bf16.msra.mxu0 0
    %369 = vmatprep.subr.bf16.mxu0 0
    %370 = vmatpush1.bf16.msra.mxu0 0
    %371 = vmatprep.mubr.bf16.mxu0 0
    %372 = vmatmul.mubr.bf16.gmra.mrb[0].mxu0 %v267
    %v373 = vpop.f32.mrb[0].mxu0
    %v374 = vadd.f32 %v289, %v373
    %v375 = vpop.f32.mrb[0].mxu0
    %v376 = vpop.f32.mrb[0].mxu0
    %v377 = vadd.f32 %v289, %v376
    %v378 = vpop.f32.mrb[0].mxu0
    %379 = vdwg.mxu0
    %vm380 = vcmask 31744
    %v381 = vsel %vm380, %v374, -inf
    %382 = vmax.xlane.f32.xlu0 %v381
    %v383 = vpop.xlane.xlu0 %382
    %v384 = vsel %vm380, %v377, -inf
    %385 = vmax.xlane.f32.xlu0 %v384
    %v386 = vpop.xlane.xlu0 %385
    %v387 = vsub.f32 %v374, %v383
    %v388 = vsub.f32 %v377, %v386
    %v389 = vmul.f32 %v387, 1.442695
    %v390 = vpow.pop %v389
    %v391 = vmul.f32 %v388, 1.442695
    %v392 = vpow.pop %v391
    %v393 = vsel %vm380, %v390, 0.0
    %394 = vadd.xlane.f32.xlu0 %v393
    %v395 = vpop.xlane.xlu0 %394
    %v396 = vsel %vm380, %v392, 0.0
    %397 = vadd.xlane.f32.xlu0 %v396
    %v398 = vpop.xlane.xlu0 %397
    %v399 = vrcp.pop %v395
    %v400 = vrcp.pop %v398
    %v401 = vmul.f32 %v390, %v399
    %v402 = vmul.f32 %v392, %v400
    %403 = vst.msk [vmem:[#allocation2] sm:$0xff] %vm380, %v401
    %404 = vst.msk [vmem:[#allocation2 + $0x8] sm:$0xff] %vm380, %v402
    // Predicated region
    $region30: #{tpu_custom_call.1} parent=1 // pred_check
      _
    $region31: #{tpu_custom_call.1} parent=1 // pred_check_branch
      %406 = sbr.rel (0) target = $region33
    $region32: #{tpu_custom_call.1} parent=1 // pred_region
      %s408 = ssub.s32 256, 32
      %409 = vsyncadd [#allocation3], %s408
      %s410 = sshll.u32 [#allocation2], 4
      %s411 = int_to_ptr.vmem [resolvable:$true] %s410
      %416 = dma.vmem_to_hbm [thread:$0]  %s411, 32, %s7, [#allocation3], 32, 32, 2
    $region33: #{tpu_custom_call.1} parent=1 // pred_fallthru
      _
    // Predicated region
    $region34: #{tpu_custom_call.1} parent=1 // pred_check
      _
    $region35: #{tpu_custom_call.1} parent=1 // pred_check_branch
      %418 = sbr.rel (0) target = $region37
    $region36: #{tpu_custom_call.1} parent=1 // pred_region
      %419 = dma.done [#allocation3], 256
    $region37: #{tpu_custom_call.1} parent=1 // pred_fallthru
      _
    %420 = vsyncpa [#allocation3], 1

</llo_original>
